<compile_context>
chip_gen: v5e
topology: v5e:2x2
jax: 0.10.0
libtpu: 0.0.40
codegen_flags: <defaults>
</compile_context>

<pallas_src>
import functools

import jax
import jax.numpy as jnp
from jax.experimental import pallas as pl
from jax.experimental.pallas import tpu as pltpu

_MIB = 1 << 20


def _vmem_budget_bytes():
    """Generation-aware scoped-VMEM ceiling, leaving headroom below physical."""
    try:
        cap = int(pltpu.get_tpu_info().vmem_capacity_bytes)
        if cap <= 0:
            raise ValueError("bad VMEM capacity")
    except Exception:  # no device / older API -> conservative fallback
        cap = 64 * _MIB
    # Leave ~16 MiB (but at least half of capacity) for compiler-internal scratch.
    return max(cap - 16 * _MIB, cap // 2)


def choose_tm(M, N, K, n_pad, w_bytes, budget_bytes):
    """Largest m-block tm such that tm | M, the lane width tm*N is a multiple of
    128 (or tm == M), and the per-step VMEM working set fits the budget."""
    candidates = [tm for tm in range(1, M + 1)
                  if M % tm == 0 and ((tm * N) % 128 == 0 or tm == M)]

    def need(tm):
        lane = tm * N
        return 2 * K * lane * w_bytes + lane * n_pad * 4  # 2x W tiles + selector

    within = [tm for tm in candidates if need(tm) <= budget_bytes]
    if not within:
        tm_min = min(candidates)
        raise ValueError(
            f"Gauss_DUQ: smallest legal m-block (tm={tm_min}) needs "
            f"{need(tm_min)} bytes of VMEM, over budget {budget_bytes}; reduce "
            f"feature sizes or use a narrower weight dtype.")
    return max(within)


def prepare_gauss_duq_params(W, m_buf, N_buf, tm=None, *, weight_dtype=jnp.bfloat16):
    """One-time (module-init) repack — NOT in the per-call path.

    Returns:
      W2: [J+1, M*N] with W2[j, m*N+n] = W[m, n, j] for j<J and
          W2[J, m*N+n] = -(m_buf/N_buf)[m, n]  (the folded -Z row)
      S : [tm*N, N_pad] 0/1 selector summing the tm m-rows of one block into a
          lane-padded (multiple-of-128) output accumulator
      tm: chosen m-block size
    """
    M, N, J = W.shape
    n_pad = int(pl.cdiv(N, 128)) * 128
    Z = m_buf.astype(jnp.float32) / N_buf.astype(jnp.float32)[None, :]       # [M, N]
    W_aug = jnp.concatenate(
        [jnp.transpose(W.astype(jnp.float32), (2, 0, 1)), -Z[None, :, :]],
        axis=0)                                                              # [J+1, M, N]
    w_bytes = jnp.dtype(weight_dtype).itemsize
    if tm is None:
        # Generation-aware tile budget: spend about half the scoped-VMEM
        # ceiling on the streamed/resident working set (big tiles amortize the
        # ~0.35 us per-grid-step overhead).
        tm = choose_tm(M, N, J + 1, n_pad, w_bytes, _vmem_budget_bytes() // 2)
    assert M % tm == 0 and ((tm * N) % 128 == 0 or tm == M)
    W2 = W_aug.reshape(J + 1, M * N).astype(weight_dtype)
    S = jnp.zeros((tm * N, n_pad), jnp.float32).at[:, :N].set(
        jnp.tile(jnp.eye(N, dtype=jnp.float32), (tm, 1)))
    return W2, S, tm


def _gauss_duq_kernel(d_ref, w_ref, s_ref, o_ref, *, scale):
    mb = pl.program_id(0)

    @pl.when(mb == 0)
    def _():
        o_ref[...] = jnp.zeros_like(o_ref)

    # One wide lane-dense MXU matmul; the folded -Z row means `dw` is already
    # (DW - Z) for this block:  [B, J+1] @ [J+1, tm*N] -> [B, tm*N]  (f32 acc)
    dw = jnp.dot(d_ref[...], w_ref[...], preferred_element_type=jnp.float32)
    sq = dw * dw
    # Sum the tm m-rows of the block into the lane-padded accumulator:
    # [B, tm*N] @ [tm*N, N_pad] -> [B, N_pad]
    # (For N >> J, swap this selector matmul for log2(tm) pltpu.roll(+add)
    #  steps so the reduction rides the idle XLU slot.)
    o_ref[...] += jnp.dot(sq, s_ref[...], preferred_element_type=jnp.float32)

    @pl.when(mb == pl.num_programs(0) - 1)
    def _():
        o_ref[...] = o_ref[...] * scale          # scale = -gamma / M


def gauss_duq_forward(D, W2, S, gamma, *, out_features):
    """D: [B, J]; W2: [J+1, M*N]; S: [tm*N, N_pad]  ->  [B, out_features] (f32)."""
    B, J = D.shape
    K, MN = W2.shape
    assert K == J + 1, "W2 must carry the folded -Z row (K = in_features + 1)"
    lane, n_pad = S.shape
    N = out_features
    tm = lane // N
    M = MN // N
    assert MN == M * N and lane == tm * N and M % tm == 0
    assert (lane % 128 == 0) or lane == MN
    assert n_pad % 128 == 0 and n_pad >= N

    # Constant 1.0 column pairs with the -Z row of W2; cast D to the (bf16 by
    # default) stream dtype — accumulation stays f32 inside the kernel.
    D_aug = jnp.concatenate([D.astype(W2.dtype), jnp.ones((B, 1), W2.dtype)],
                            axis=1)                                # [B, J+1]

    w_bytes = jnp.dtype(W2.dtype).itemsize
    budget = _vmem_budget_bytes()
    vmem_need = (2 * K * lane * w_bytes            # double-buffered W2 tiles
                 + lane * n_pad * 4                # resident selector S
                 + 2 * B * K * w_bytes             # D_aug (resident, small)
                 + 2 * B * n_pad * 4)              # f32 output accumulator
    vmem_limit = int(min(budget, max(2 * vmem_need, 32 * _MIB)))

    out_dtype = jnp.float32
    # Output doubles as the f32 accumulator (constant out index_map) — only
    # valid while the output dtype stays float32.
    assert out_dtype == jnp.float32

    kernel = functools.partial(_gauss_duq_kernel, scale=-float(gamma) / float(M))
    out = pl.pallas_call(
        kernel,
        out_shape=jax.ShapeDtypeStruct((B, n_pad), out_dtype),
        grid_spec=pltpu.PrefetchScalarGridSpec(
            num_scalar_prefetch=0,
            grid=(M // tm,),
            in_specs=[
                pl.BlockSpec((B, K), lambda mb: (0, 0)),          # D_aug: resident
                pl.BlockSpec((K, lane), lambda mb: (0, mb)),      # W2: streamed tiles
                pl.BlockSpec((lane, n_pad), lambda mb: (0, 0)),   # S: resident
            ],
            out_specs=pl.BlockSpec((B, n_pad), lambda mb: (0, 0)),  # accumulator
        ),
        compiler_params=pltpu.CompilerParams(
            # NOTE(v7x): add a leading "parallel" axis (split m-blocks or batch)
            # when M/B are large so the second TensorCore isn't idle.
            dimension_semantics=("arbitrary",),
            vmem_limit_bytes=vmem_limit,
        ),
    )(D_aug, W2, S)
    return out[:, :N]   # drop the lane padding (layout plumbing, not compute)


def gauss_duq_ref(D, W, m_buf, N_buf, gamma):
    DW = jnp.einsum('ij,mnj->imn', D, W)
    Z = m_buf / N_buf[None, :]
    out = DW - Z[None]
    return -gamma * jnp.mean(out ** 2, axis=1)


# TODO(synk): update_centroids / conf (EMA buffer updates) are training-time
# host-side ops and are not part of this forward kernel.

if __name__ == "__main__":
    key = jax.random.PRNGKey(0)
    B, in_features, out_features = 8, 32, 16
    gamma = 0.1

    k_d, k_m, k_w = jax.random.split(key, 3)
    D = jax.random.normal(k_d, (B, in_features), dtype=jnp.float32)

    # Buffers as in Gauss_DUQ.__init__ (deterministic synthetic init):
    N_buf = jnp.ones((out_features,), jnp.float32) * 10.0                    # N_init
    m_buf = 0.05 * jax.random.normal(k_m, (in_features, out_features), jnp.float32)
    m_buf = m_buf * N_buf[None, :]                                           # self.m = m * N
    fan_in = out_features * in_features                                      # kaiming_normal_(relu)
    W = jax.random.normal(
        k_w, (in_features, out_features, in_features), jnp.float32
    ) * jnp.sqrt(2.0 / fan_in)

    ref = gauss_duq_ref(D, W, m_buf, N_buf, gamma)

    # 1) Default bf16 weight stream; tm=8 (lane width 8*16 = 128) forces a
    #    4-step grid so the multi-block accumulation path is exercised.
    W2, S, tm = prepare_gauss_duq_params(W, m_buf, N_buf, tm=8)    # once, at "init"
    out_bf16 = jax.block_until_ready(
        gauss_duq_forward(D, W2, S, gamma, out_features=out_features))
    assert out_bf16.shape == (B, out_features)
    assert jnp.allclose(out_bf16, ref, rtol=2e-2, atol=1e-3), \
        float(jnp.max(jnp.abs(out_bf16 - ref)))

    # 2) f32 weight stream with auto (generation-aware) tile size: strict check.
    W2f, Sf, tmf = prepare_gauss_duq_params(W, m_buf, N_buf,
                                            weight_dtype=jnp.float32)
    out_f32 = jax.block_until_ready(
        gauss_duq_forward(D, W2f, Sf, gamma, out_features=out_features))
    assert out_f32.shape == (B, out_features)
    assert jnp.allclose(out_f32, ref, rtol=1e-4, atol=1e-5), \
        float(jnp.max(jnp.abs(out_f32 - ref)))

    print("KERNEL_OK")
</pallas_src>

<mosaic_0001>
module attributes {stable_mosaic.version = 11 : i64} {
  func.func @_gauss_duq_kernel(%arg0: i32, %arg1: memref<8x33xbf16, #tpu.memory_space<vmem>>, %arg2: memref<33x128xbf16, #tpu.memory_space<vmem>>, %arg3: memref<128x128xf32, #tpu.memory_space<vmem>>, %arg4: memref<8x128xf32, #tpu.memory_space<vmem>>) attributes {dimension_semantics = [#tpu.dimension_semantics<arbitrary>], iteration_bounds = array<i64: 4>, scalar_prefetch = 0 : i64, scratch_operands = 0 : i64, tpu.core_type = #tpu.core_type<tc>, window_params = [{pipeline_mode = #tpu.pipeline_mode<synchronous>, transform_indices = @transform_0, window_bounds = array<i64: 8, 33>}, {transform_indices = @transform_1, window_bounds = array<i64: 33, 128>}, {pipeline_mode = #tpu.pipeline_mode<synchronous>, transform_indices = @transform_2, window_bounds = array<i64: 128, 128>}, {pipeline_mode = #tpu.pipeline_mode<synchronous>, transform_indices = @transform_3, window_bounds = array<i64: 8, 128>}]} {
    %c0_i32 = arith.constant 0 : i32
    %0 = arith.cmpi eq, %arg0, %c0_i32 : i32
    %1 = arith.extui %0 : i1 to i32
    %c0_i32_0 = arith.constant 0 : i32
    %2 = arith.cmpi ne, %1, %c0_i32_0 : i32
    scf.if %2 {
      %cst_12 = arith.constant 0.000000e+00 : f32
      %15 = vector.broadcast %cst_12 : f32 to vector<8x128xf32>
      %c0_13 = arith.constant 0 : index
      %c0_14 = arith.constant 0 : index
      %16 = vector.load %arg4[%c0_13, %c0_14] : memref<8x128xf32, #tpu.memory_space<vmem>>, vector<8x128xf32>
      tpu.vector_store %arg4[%c0_13, %c0_14], %15 {strides = array<i32>} : memref<8x128xf32, #tpu.memory_space<vmem>>, vector<8x128xf32>,
    } else {
    }
    %c0 = arith.constant 0 : index
    %c0_1 = arith.constant 0 : index
    %3 = vector.load %arg1[%c0, %c0_1] : memref<8x33xbf16, #tpu.memory_space<vmem>>, vector<8x33xbf16>
    %c0_2 = arith.constant 0 : index
    %c0_3 = arith.constant 0 : index
    %4 = vector.load %arg2[%c0_2, %c0_3] : memref<33x128xbf16, #tpu.memory_space<vmem>>, vector<33x128xbf16>
    %cst = arith.constant dense<0.000000e+00> : vector<8x128xf32>
    %5 = tpu.matmul %3, %4, %cst {dimension_numbers = #tpu.dot_dimension_numbers<[1], [0], [0], [1], [0, 0, 1, 1], [], []>} : vector<8x33xbf16>, vector<33x128xbf16>, vector<8x128xf32> -> vector<8x128xf32>
    %6 = arith.mulf %5, %5 : vector<8x128xf32>
    %c0_4 = arith.constant 0 : index
    %c0_5 = arith.constant 0 : index
    %7 = vector.load %arg4[%c0_4, %c0_5] : memref<8x128xf32, #tpu.memory_space<vmem>>, vector<8x128xf32>
    %c0_6 = arith.constant 0 : index
    %c0_7 = arith.constant 0 : index
    %8 = vector.load %arg3[%c0_6, %c0_7] : memref<128x128xf32, #tpu.memory_space<vmem>>, vector<128x128xf32>
    %cst_8 = arith.constant dense<0.000000e+00> : vector<8x128xf32>
    %9 = tpu.matmul %6, %8, %cst_8 {dimension_numbers = #tpu.dot_dimension_numbers<[1], [0], [0], [1], [0, 0, 1, 1], [], []>} : vector<8x128xf32>, vector<128x128xf32>, vector<8x128xf32> -> vector<8x128xf32>
    %10 = arith.addf %7, %9 : vector<8x128xf32>
    %c0_9 = arith.constant 0 : index
    %c0_10 = arith.constant 0 : index
    %11 = vector.load %arg4[%c0_9, %c0_10] : memref<8x128xf32, #tpu.memory_space<vmem>>, vector<8x128xf32>
    tpu.vector_store %arg4[%c0_9, %c0_10], %10 {strides = array<i32>} : memref<8x128xf32, #tpu.memory_space<vmem>>, vector<8x128xf32>,
    %c3_i32 = arith.constant 3 : i32
    %12 = arith.cmpi eq, %arg0, %c3_i32 : i32
    %13 = arith.extui %12 : i1 to i32
    %c0_i32_11 = arith.constant 0 : i32
    %14 = arith.cmpi ne, %13, %c0_i32_11 : i32
    scf.if %14 {
      %c0_12 = arith.constant 0 : index
      %c0_13 = arith.constant 0 : index
      %15 = vector.load %arg4[%c0_12, %c0_13] : memref<8x128xf32, #tpu.memory_space<vmem>>, vector<8x128xf32>
      %cst_14 = arith.constant -3.125000e-03 : f32
      %16 = vector.broadcast %cst_14 : f32 to vector<8x128xf32>
      %17 = arith.mulf %15, %16 : vector<8x128xf32>
      %c0_15 = arith.constant 0 : index
      %c0_16 = arith.constant 0 : index
      %18 = vector.load %arg4[%c0_15, %c0_16] : memref<8x128xf32, #tpu.memory_space<vmem>>, vector<8x128xf32>
      tpu.vector_store %arg4[%c0_15, %c0_16], %17 {strides = array<i32>} : memref<8x128xf32, #tpu.memory_space<vmem>>, vector<8x128xf32>,
    } else {
    }
    return
  }
  func.func @transform_0(%arg0: i32) -> (i32, i32) {
    %c0_i32 = arith.constant 0 : i32
    %c0_i32_0 = arith.constant 0 : i32
    %c0_i32_1 = arith.constant 0 : i32
    return %c0_i32, %c0_i32_0 : i32, i32
  }
  func.func @transform_1(%arg0: i32) -> (i32, i32) {
    %c0_i32 = arith.constant 0 : i32
    %c0_i32_0 = arith.constant 0 : i32
    return %c0_i32, %arg0 : i32, i32
  }
  func.func @transform_2(%arg0: i32) -> (i32, i32) {
    %c0_i32 = arith.constant 0 : i32
    %c0_i32_0 = arith.constant 0 : i32
    %c0_i32_1 = arith.constant 0 : i32
    return %c0_i32, %c0_i32_0 : i32, i32
  }
  func.func @transform_3(%arg0: i32) -> (i32, i32) {
    %c0_i32 = arith.constant 0 : i32
    %c0_i32_0 = arith.constant 0 : i32
    %c0_i32_1 = arith.constant 0 : i32
    return %c0_i32, %c0_i32_0 : i32, i32
  }
}

</mosaic_0001>

<llo_original>
// kernel: tpu_custom_call.1
$region0: #{tpu_custom_call.1}
  #allocation0 [shape = 'u32[]', space=smem, size = 0x4, offset = 0x4, fixed_abs, tag = 'smem constant byte address 0x4 - core index']
  #allocation1 [shape = 'u32[72,128]{1,0:T(1,128)}', space=vmem, size = 0x9000, scoped, tag = 'internal scratch']
  %s0 = inlined_call_operand.hbm [shape: bf16[8,33], index: 0, kind: input, shape index: {}]
  %s1 = inlined_call_operand.hbm [shape: bf16[33,512], index: 1, kind: input, shape index: {}]
  %s2 = inlined_call_operand.hbm [shape: f32[128,128], index: 2, kind: input, shape index: {}]
  %s3 = inlined_call_operand.hbm [shape: f32[8,128], index: 3, kind: output, shape index: {}]
  %s4 = sld [smem:[#allocation0]]
  $region65: #{tpu_custom_call.1} parent=0
    _
  %s6 = ssub.s32 1, %s4
  %s7 = scalar_select 0, %s6, %s4
  $region1: #{tpu_custom_call.1} parent=0
    #allocation2 [shape = 'u8[2048]{0}', space=vmem, size = 0x800, scoped, tag = 'input window, operand 0, single buffered']
    #allocation3 [shape = 's32[2]{0}', space=sflag, size = 0x8, scoped, tag = 'scoped memory for tpu_custom_call.1']
    #allocation4 [shape = 's32[2]{0}', space=sflag, size = 0x8, scoped, tag = 'scoped memory for tpu_custom_call.1']
    #allocation5 [shape = 'u8[20480]{0}', space=vmem, size = 0x5000, scoped, tag = 'input window, operand 1']
    #allocation6 [shape = 's32[2]{0}', space=sflag, size = 0x8, scoped, tag = 'scoped memory for tpu_custom_call.1']
    #allocation7 [shape = 'u8[65536]{0}', space=vmem, size = 0x10000, scoped, tag = 'input window, operand 2, single buffered']
    #allocation8 [shape = 'u8[4096]{0}', space=vmem, size = 0x1000, scoped, tag = 'output window, operand 0, single buffered']
    %8 = vsyncpa [#allocation3], 0
    %9 = vsyncpa [#allocation6], 0
    %s10 = scalar_lea.sflag [#allocation6], 1
    %11 = vsyncpa %s10, 0
    %12 = vsyncpa [#allocation4], 0
    loop: start=0, step=1, limit=6
    $region2: #{tpu_custom_call.1} parent=1 // loop_pre_header
      _
    $region3: #{tpu_custom_call.1} parent=1 // loop_header
      %s14 = sphi 0, %s18
      %p15 = scmp.ge.s32.totalorder %s14, 6
      %s22 = sphi 0, %s22
      %s24 = sphi 0, %s22
      %s25 = sphi 0, %s24
      %s39 = sphi 0, %s25
      %s45 = sphi 0, %s47
      %s48 = sphi 0, %s45
      %s49 = sphi 0, %s48
      %s65 = sphi 0, %s49
      %s69 = sphi 0, %s69
      %s71 = sphi 0, %s69
      %s72 = sphi 0, %s71
      %s86 = sphi 0, %s72
      %s90 = sphi 0, %s90
      %s92 = sphi 0, %s90
      %s93 = sphi 0, %s92
      %s107 = sphi 0, %s93
    $region4: #{tpu_custom_call.1} parent=1 // loop_header_branch
      %17 = sbr.rel (%p15) target = $region8
    $region5: #{tpu_custom_call.1} parent=1 // loop_body
      %s19 = ssub.s32 %s14, 1
      %s20 = ssub.s32 %s14, 2
      %s21 = sadd.s32 %s14, 1
      %s23 = sadd.s32 %s22, 1
      %p26 = scmp.eq.s32.totalorder %s14, 3
      %p27 = scmp.ne.s32.totalorder %s22, %s24
      %p28 = scmp.eq.s32.totalorder %s14, 0
      %p29 = por %p27, %p28
      %p30 = scmp.ne.s32.totalorder %s22, %s24
      %p31 = scmp.eq.s32.totalorder %s19, 3
      %p32 = por %p30, %p31
      %p33 = scmp.ne.s32.totalorder %s24, %s25
      %p34 = scmp.eq.s32.totalorder %s19, 0
      %p35 = por %p33, %p34
      %p36 = scmp.ne.s32.totalorder %s24, %s25
      %p37 = scmp.eq.s32.totalorder %s20, 3
      %p38 = por %p36, %p37
      %p40 = scmp.ne.s32.totalorder %s25, %s39
      %p41 = scmp.eq.s32.totalorder %s20, 0
      %p42 = por %p40, %p41
      %s43 = ssub.s32 %s14, %s21
      %p44 = scmp.eq.s32.totalorder %s43, 0
      %s46 = sadd.s32 %s45, 1
      %s47 = scalar_select %p44, %s45, %s46
      %p50 = pneg %p44
      %p51 = scmp.eq.s32.totalorder %s14, 3
      %p52 = por %p50, %p51
      %p53 = scmp.ne.s32.totalorder %s45, %s48
      %p54 = scmp.eq.s32.totalorder %s14, 0
      %p55 = por %p53, %p54
      %p56 = scmp.ne.s32.totalorder %s45, %s48
      %p57 = scmp.eq.s32.totalorder %s19, 3
      %p58 = por %p56, %p57
      %p59 = scmp.ne.s32.totalorder %s48, %s49
      %p60 = scmp.eq.s32.totalorder %s19, 0
      %p61 = por %p59, %p60
      %p62 = scmp.ne.s32.totalorder %s48, %s49
      %p63 = scmp.eq.s32.totalorder %s20, 3
      %p64 = por %p62, %p63
      %p66 = scmp.ne.s32.totalorder %s49, %s65
      %p67 = scmp.eq.s32.totalorder %s20, 0
      %p68 = por %p66, %p67
      %s70 = sadd.s32 %s69, 1
      %p73 = scmp.eq.s32.totalorder %s14, 3
      %p74 = scmp.ne.s32.totalorder %s69, %s71
      %p75 = scmp.eq.s32.totalorder %s14, 0
      %p76 = por %p74, %p75
      %p77 = scmp.ne.s32.totalorder %s69, %s71
      %p78 = scmp.eq.s32.totalorder %s19, 3
      %p79 = por %p77, %p78
      %p80 = scmp.ne.s32.totalorder %s71, %s72
      %p81 = scmp.eq.s32.totalorder %s19, 0
      %p82 = por %p80, %p81
      %p83 = scmp.ne.s32.totalorder %s71, %s72
      %p84 = scmp.eq.s32.totalorder %s20, 3
      %p85 = por %p83, %p84
      %p87 = scmp.ne.s32.totalorder %s72, %s86
      %p88 = scmp.eq.s32.totalorder %s20, 0
      %p89 = por %p87, %p88
      %s91 = sadd.s32 %s90, 1
      %p94 = scmp.eq.s32.totalorder %s14, 3
      %p95 = scmp.ne.s32.totalorder %s90, %s92
      %p96 = scmp.eq.s32.totalorder %s14, 0
      %p97 = por %p95, %p96
      %p98 = scmp.ne.s32.totalorder %s90, %s92
      %p99 = scmp.eq.s32.totalorder %s19, 3
      %p100 = por %p98, %p99
      %p101 = scmp.ne.s32.totalorder %s92, %s93
      %p102 = scmp.eq.s32.totalorder %s19, 0
      %p103 = por %p101, %p102
      %p104 = scmp.ne.s32.totalorder %s92, %s93
      %p105 = scmp.eq.s32.totalorder %s20, 3
      %p106 = por %p104, %p105
      %p108 = scmp.ne.s32.totalorder %s93, %s107
      %p109 = scmp.eq.s32.totalorder %s20, 0
      %p110 = por %p108, %p109
      %p111 = scmp.le.s32.totalorder 1, %s14
      %p112 = scmp.lt.s32.totalorder %s14, 5
      %p113 = pnand %p111, %p112
      %p114 = pneg %p113
      // Predicated region
      $region9: #{tpu_custom_call.1} parent=5 // pred_check
        _
      $region10: #{tpu_custom_call.1} parent=5 // pred_check_branch
        %116 = sbr.rel (%p113) target = $region12
      $region11: #{tpu_custom_call.1} parent=5 // pred_region
        %s117 = ssub.s32 %s14, 1
        // Predicated region
        $region13: #{tpu_custom_call.1} parent=11 // pred_check
          %p118 = pneg %p35
        $region14: #{tpu_custom_call.1} parent=11 // pred_check_branch
          %120 = sbr.rel (%p118) target = $region16
        $region15: #{tpu_custom_call.1} parent=11 // pred_region
          %122 = vsyncadd [#allocation3], 0
          %s124 = sshll.u32 %s0, 4
          %s125 = int_to_ptr.hbm [resolvable:$true] %s124
          %s126 = sshll.u32 [#allocation2], 4
          %s127 = int_to_ptr.vmem [resolvable:$true] %s126
          %129 = dma.hbm_to_vmem [thread:$0]  %s125, 64, %s127, [#allocation3]
        $region16: #{tpu_custom_call.1} parent=11 // pred_fallthru
          _
        // Predicated region
        $region17: #{tpu_custom_call.1} parent=11 // pred_check
          %p130 = pneg %p82
        $region18: #{tpu_custom_call.1} parent=11 // pred_check_branch
          %132 = sbr.rel (%p130) target = $region20
        $region19: #{tpu_custom_call.1} parent=11 // pred_region
          %134 = vsyncadd [#allocation6], 0
          %s135 = sshll.u32 %s2, 4
          %s136 = int_to_ptr.hbm [resolvable:$true] %s135
          %s137 = sshll.u32 [#allocation7], 4
          %s138 = int_to_ptr.vmem [resolvable:$true] %s137
          %143 = dma.hbm_to_vmem [thread:$0]  %s136, 2048, %s138, [#allocation6], 128, 128, 8
        $region20: #{tpu_custom_call.1} parent=11 // pred_fallthru
          _
      $region12: #{tpu_custom_call.1} parent=5 // pred_fallthru
        _
      %p144 = scmp.lt.s32.totalorder %s14, 4
      // Predicated region
      $region21: #{tpu_custom_call.1} parent=5 // pred_check
        %p145 = pneg %p144
      $region22: #{tpu_custom_call.1} parent=5 // pred_check_branch
        %147 = sbr.rel (%p145) target = $region24
      $region23: #{tpu_custom_call.1} parent=5 // pred_region
        // Predicated region
        $region25: #{tpu_custom_call.1} parent=23 // pred_check
          %p148 = pneg %p55
        $region26: #{tpu_custom_call.1} parent=23 // pred_check_branch
          %150 = sbr.rel (%p148) target = $region28
        $region27: #{tpu_custom_call.1} parent=23 // pred_region
          %s151 = sand.u32 %s14, 1
          %s152 = scalar_lea.sflag [#allocation6], %s151
          %s153 = sand.u32 %s45, 1
          %s154 = smul.addr %s153, 20
          %s155 = scalar_lea.vmem [#allocation5], %s154
          %157 = vsyncadd %s152, 0
          %s158 = smul.addr %s14, 4
          %s159 = scalar_lea.hbm %s1, %s158
          %s160 = sshll.u32 %s159, 4
          %s161 = int_to_ptr.hbm [resolvable:$true] %s160
          %s162 = sshll.u32 %s155, 4
          %s163 = int_to_ptr.vmem [resolvable:$true] %s162
          %168 = dma.hbm_to_vmem [thread:$0]  %s161, 320, %s163, %s152, 256, 64, 4
        $region28: #{tpu_custom_call.1} parent=23 // pred_fallthru
          _
      $region24: #{tpu_custom_call.1} parent=5 // pred_fallthru
        _
      %p169 = scmp.le.s32.totalorder 1, %s14
      %p170 = scmp.lt.s32.totalorder %s14, 5
      %p171 = pnand %p169, %p170
      %p172 = pneg %p171
      // Predicated region
      $region29: #{tpu_custom_call.1} parent=5 // pred_check
        _
      $region30: #{tpu_custom_call.1} parent=5 // pred_check_branch
        %174 = sbr.rel (%p171) target = $region32
      $region31: #{tpu_custom_call.1} parent=5 // pred_region
        %s175 = ssub.s32 %s14, 1
        // Predicated region
        $region33: #{tpu_custom_call.1} parent=31 // pred_check
          %p176 = pneg %p35
        $region34: #{tpu_custom_call.1} parent=31 // pred_check_branch
          %178 = sbr.rel (%p176) target = $region36
        $region35: #{tpu_custom_call.1} parent=31 // pred_region
          %180 = dma.done [#allocation3], 64
        $region36: #{tpu_custom_call.1} parent=31 // pred_fallthru
          _
        %s181 = sand.u32 %s19, 1
        %s182 = scalar_lea.sflag [#allocation6], %s181
        %s183 = sand.u32 %s48, 1
        %s184 = smul.addr %s183, 20
        %s185 = scalar_lea.vmem [#allocation5], %s184
        // Predicated region
        $region37: #{tpu_custom_call.1} parent=31 // pred_check
          %p186 = pneg %p61
        $region38: #{tpu_custom_call.1} parent=31 // pred_check_branch
          %188 = sbr.rel (%p186) target = $region40
        $region39: #{tpu_custom_call.1} parent=31 // pred_region
          %190 = dma.done %s182, 320
        $region40: #{tpu_custom_call.1} parent=31 // pred_fallthru
          _
        // Predicated region
        $region41: #{tpu_custom_call.1} parent=31 // pred_check
          %p191 = pneg %p82
        $region42: #{tpu_custom_call.1} parent=31 // pred_check_branch
          %193 = sbr.rel (%p191) target = $region44
        $region43: #{tpu_custom_call.1} parent=31 // pred_region
          %195 = dma.done [#allocation6], 2048
        $region44: #{tpu_custom_call.1} parent=31 // pred_fallthru
          _
        %p196 = pneg %p35
        %p197 = pneg %p32
        %s198 = sand.u32 %s19, 1
        %s199 = scalar_lea.sflag [#allocation6], %s198
        %s200 = sand.u32 %s48, 1
        %s201 = smul.addr %s200, 20
        %s202 = scalar_lea.vmem [#allocation5], %s201
        %p203 = pneg %p61
        %p204 = pneg %p58
        %p205 = pneg %p82
        %p206 = pneg %p79
        %p207 = pneg %p103
        %p208 = pneg %p100
        %p210 = scmp.eq.s32.totalorder %s19, 0
        // Predicated region
        $region45: #{tpu_custom_call.1} parent=31 // pred_check
          %p211 = pneg %p210
        $region46: #{tpu_custom_call.1} parent=31 // pred_check_branch
          %213 = sbr.rel (%p211) target = $region48
        $region47: #{tpu_custom_call.1} parent=31 // pred_region
          %214 = vst [vmem:[#allocation8] sm:$0xff] 0.0
        $region48: #{tpu_custom_call.1} parent=31 // pred_fallthru
          _
        %v215 = vld [vmem:[#allocation2] sm:$0xf]
        %v216 = vld [vmem:[%s185] sm:$0xf]
        %v217 = vld [vmem:[%s185 + $0x4] sm:$0xf]
        %v218 = vld [vmem:[%s185 + $0x8] sm:$0xf]
        %v219 = vld [vmem:[%s185 + $0xc] sm:$0xf]
        %v220 = vld [vmem:[%s185 + $0x10] sm:$0x1]
        %v226 = vunpack.c.l.b16 %v216
        %v227 = vunpack.c.l.b16 %v217
        %v228 = vunpack.c.l.b16 %v218
        %v229 = vunpack.c.l.b16 %v219
        %v230 = vunpack.c.l.b16 %v220
        %v231 = vpack.c.b16 %v227, %v226
        %v232 = vpack.c.b16 %v229, %v228
        %v233 = vpack.c.b16 %v230, %v230
        %vm236 = vcmask 269312
        %v238 = vsel %vm236, %v215, 0
        %vm240 = vcmask 1040384
        %v241 = vsel 0, 4294967295, 65535
        %v242 = vsel %vm240, %v241, 0
        %v244 = vand.u32 %v233, %v242
        %246 = vmatpush.bf16.msra.mxu0 0
        %247 = vmatpush.bf16.msra.mxu0 0
        %248 = vmatpush.bf16.msra.mxu0 0
        %249 = vmatpush.bf16.msra.mxu0 0
        %250 = vmatpush.bf16.msra.mxu0 0
        %251 = vmatpush.bf16.msra.mxu0 %v244
        %252 = vmatpush.bf16.msra.mxu0 %v232
        %253 = vmatpush.bf16.msra.mxu0 %v231
        %254 = vmatmul.bf16.gmra.mxu0 %v238
        %v255 = vpop.f32.mrf.mxu0
        %v256 = vadd.f32 0.0, %v255
        %v257 = vpop.f32.mrf.mxu0
        %258 = vdwg.mxu0
        %v259 = vmul.f32 %v256, %v256
        %v260 = vld [vmem:[#allocation8] sm:$0xff]
        %v261 = vld [vmem:[#allocation7] sm:$0xff]
        %v262 = vld [vmem:[#allocation7 + $0x8] sm:$0xff]
        %v263 = vld [vmem:[#allocation7 + $0x10] sm:$0xff]
        %v264 = vld [vmem:[#allocation7 + $0x18] sm:$0xff]
        %v265 = vld [vmem:[#allocation7 + $0x20] sm:$0xff]
        %v266 = vld [vmem:[#allocation7 + $0x28] sm:$0xff]
        %v267 = vld [vmem:[#allocation7 + $0x30] sm:$0xff]
        %v268 = vld [vmem:[#allocation7 + $0x38] sm:$0xff]
        %v269 = vld [vmem:[#allocation7 + $0x40] sm:$0xff]
        %v270 = vld [vmem:[#allocation7 + $0x48] sm:$0xff]
        %v271 = vld [vmem:[#allocation7 + $0x50] sm:$0xff]
        %v272 = vld [vmem:[#allocation7 + $0x58] sm:$0xff]
        %v273 = vld [vmem:[#allocation7 + $0x60] sm:$0xff]
        %v274 = vld [vmem:[#allocation7 + $0x68] sm:$0xff]
        %v275 = vld [vmem:[#allocation7 + $0x70] sm:$0xff]
        %v276 = vld [vmem:[#allocation7 + $0x78] sm:$0xff]
        %277 = vmatpush.msra.mxu0 %v276
        %278 = vmatpush.msra.mxu0 %v275
        %279 = vmatpush.msra.mxu0 %v274
        %280 = vmatpush.msra.mxu0 %v273
        %281 = vmatpush.msra.mxu0 %v272
        %282 = vmatpush.msra.mxu0 %v271
        %283 = vmatpush.msra.mxu0 %v270
        %284 = vmatpush.msra.mxu0 %v269
        %285 = vmatpush.msra.mxu0 %v268
        %286 = vmatpush.msra.mxu0 %v267
        %287 = vmatpush.msra.mxu0 %v266
        %288 = vmatpush.msra.mxu0 %v265
        %289 = vmatpush.msra.mxu0 %v264
        %290 = vmatpush.msra.mxu0 %v263
        %291 = vmatpush.msra.mxu0 %v262
        %292 = vmatpush.msra.mxu0 %v261
        %293 = vmatmul.f32.gmra.mxu0 %v259
        %v294 = vpop.f32.mrf.mxu0
        %v295 = vadd.f32 0.0, %v294
        %296 = vdwg.mxu0
        %v297 = vadd.f32 %v260, %v295
        %298 = vst [vmem:[#allocation8] sm:$0xff] %v297
        %p299 = scmp.eq.s32.totalorder %s19, 3
        // Predicated region
        $region49: #{tpu_custom_call.1} parent=31 // pred_check
          %p300 = pneg %p299
        $region50: #{tpu_custom_call.1} parent=31 // pred_check_branch
          %302 = sbr.rel (%p300) target = $region52
        $region51: #{tpu_custom_call.1} parent=31 // pred_region
          %v303 = vld [vmem:[#allocation8] sm:$0xff]
          %v304 = vmul.f32 %v303, -0.003125
          %305 = vst [vmem:[#allocation8] sm:$0xff] %v304
        $region52: #{tpu_custom_call.1} parent=31 // pred_fallthru
          _
        // Predicated region
        $region53: #{tpu_custom_call.1} parent=31 // pred_check
          %p306 = pneg %p100
        $region54: #{tpu_custom_call.1} parent=31 // pred_check_branch
          %308 = sbr.rel (%p306) target = $region56
        $region55: #{tpu_custom_call.1} parent=31 // pred_region
          %310 = vsyncadd [#allocation4], 0
          %s312 = sshll.u32 [#allocation8], 4
          %s313 = int_to_ptr.vmem [resolvable:$true] %s312
          %s314 = sshll.u32 %s3, 4
          %s315 = int_to_ptr.hbm [resolvable:$true] %s314
          %317 = dma.vmem_to_hbm [thread:$0]  %s313, 128, %s315, [#allocation4]
        $region56: #{tpu_custom_call.1} parent=31 // pred_fallthru
          _
        // Predicated region
        $region57: #{tpu_custom_call.1} parent=31 // pred_check
          %p318 = pneg %p100
        $region58: #{tpu_custom_call.1} parent=31 // pred_check_branch
          %320 = sbr.rel (%p318) target = $region60
        $region59: #{tpu_custom_call.1} parent=31 // pred_region
          %322 = dma.done [#allocation4], 128
        $region60: #{tpu_custom_call.1} parent=31 // pred_fallthru
          _
      $region32: #{tpu_custom_call.1} parent=5 // pred_fallthru
        _
      %p323 = scmp.le.s32.totalorder 2, %s14
      // Predicated region
      $region61: #{tpu_custom_call.1} parent=5 // pred_check
        %p324 = pneg %p323
      $region62: #{tpu_custom_call.1} parent=5 // pred_check_branch
        %326 = sbr.rel (%p324) target = $region64
      $region63: #{tpu_custom_call.1} parent=5 // pred_region
        %s327 = ssub.s32 %s14, 2
      $region64: #{tpu_custom_call.1} parent=5 // pred_fallthru
        _
    $region6: #{tpu_custom_call.1} parent=1 // loop_footer
      %s18 = sadd.s32 1, %s14
    $region7: #{tpu_custom_call.1} parent=1 // loop_footer_branch
      %13 = sbr.rel target = $region3
    $region8: #{tpu_custom_call.1} parent=1 // loop_exit
      _
    %328 = vsyncpa [#allocation3], 1
    %s329 = scalar_lea.sflag [#allocation3], 1
    %330 = vsyncpa %s329, 1
    %331 = vsyncpa [#allocation6], 1
    %s332 = scalar_lea.sflag [#allocation6], 1
    %333 = vsyncpa %s332, 1
    %334 = vsyncpa [#allocation4], 1
    %s335 = scalar_lea.sflag [#allocation4], 1
    %336 = vsyncpa %s335, 1

</llo_original>
